<compile_context>
chip_gen: v6e
topology: v6e:2x2x1
jax: 0.10.0
libtpu: 0.0.40
codegen_flags: <defaults>
</compile_context>

<pallas_src>
import functools

import jax
import jax.numpy as jnp
from jax import lax
from jax.experimental import pallas as pl
from jax.experimental.pallas import tpu as pltpu

F = 8                        # config.NUM_FEATURES (synthetic, small)
N = [10, 15, 20]
# layer widths along the chain: f -> 10f -> 15f -> 20f -> 15f -> 10f -> f
DIMS = [F, F * N[0], F * N[1], F * N[2], F * N[1], F * N[0], F]   # 8,80,120,160,120,80,8

CHUNK = 128                                   # batch rows per in-kernel step
W_ROW_OFF = [0]
for _d in DIMS[:6]:
    W_ROW_OFF.append(W_ROW_OFF[-1] + _d)      # [0, 8, 88, 208, 368, 488, 568] (all 8-aligned)
W_ROWS = W_ROW_OFF[-1]                        # 568
W_COLS = max(DIMS[1:])                        # 160
B_ROWS = 8                                    # 6 bias rows, padded to a sublane multiple


def dae_kernel(x_ref, w_ref, b_ref, enc_ref, dec_ref):
    # nn.Dropout(0.1) is identity at inference time (eval mode).
    # TODO(synk): training-mode dropout (random masking + 1/(1-p) scaling) not emulated.
    n_chunks = x_ref.shape[0] // CHUNK

    def layer(h_bf16, li):
        fan_in, fan_out = DIMS[li], DIMS[li + 1]
        r0 = W_ROW_OFF[li]
        w = w_ref[r0:r0 + fan_in, 0:fan_out]      # static 8-aligned slice, bf16 (in, out)
        b = b_ref[li:li + 1, 0:fan_out]           # (1, fan_out) f32, broadcasts over rows
        y = jnp.dot(h_bf16, w, preferred_element_type=jnp.float32)   # MXU, f32 accumulate
        return y + b

    def chunk_body(c, carry):
        r = pl.multiple_of(c * CHUNK, CHUNK)
        h = x_ref[pl.ds(r, CHUNK), :].astype(jnp.bfloat16)   # cast in-kernel (VPU)

        # ---- encoder ----
        h = layer(h, 0)
        h = layer(h.astype(jnp.bfloat16), 1)
        h = layer(h.astype(jnp.bfloat16), 2)
        enc_ref[pl.ds(r, CHUNK), :] = h.astype(enc_ref.dtype)   # (CHUNK, 160), no transpose

        # ---- decoder ----
        d = layer(h.astype(jnp.bfloat16), 3)
        d = layer(d.astype(jnp.bfloat16), 4)
        d = layer(d.astype(jnp.bfloat16), 5)
        dec_ref[pl.ds(r, CHUNK), :] = jax.nn.sigmoid(d).astype(dec_ref.dtype)
        return carry

    lax.fori_loop(0, n_chunks, chunk_body, 0)


def _tensorcores_per_chip():
    """1 for single-TC chips (v5e/v6e) -> grid=(1,); 2 for megacore/dual-TC (v4/v5p/v7x)."""
    try:
        kind = jax.devices()[0].device_kind.lower()
    except Exception:
        return 1
    if "lite" in kind or "v5e" in kind or "v6e" in kind:
        return 1
    if "v4" in kind or "v5p" in kind or "v7" in kind or "7x" in kind:
        return 2
    return 1


@functools.partial(jax.jit, static_argnames=("tb",))
def _dae_forward_impl(x, w_packed, b_packed, *, tb):
    B = x.shape[0]
    grid = (B // tb,)

    in_specs = [
        pl.BlockSpec((tb, F), lambda i: (i, 0)),               # x tile (batch, features)
        pl.BlockSpec((W_ROWS, W_COLS), lambda i: (0, 0)),      # packed weights, DMA'd once
        pl.BlockSpec((B_ROWS, W_COLS), lambda i: (0, 0)),      # packed biases, DMA'd once
    ]
    out_specs = (
        pl.BlockSpec((tb, DIMS[3]), lambda i: (i, 0)),         # encoded (B, 160)
        pl.BlockSpec((tb, F), lambda i: (i, 0)),               # decoded (B, 8)
    )
    out_shape = (
        jax.ShapeDtypeStruct((B, DIMS[3]), jnp.float32),
        jax.ShapeDtypeStruct((B, F), jnp.float32),
    )

    flops = 2 * B * sum(DIMS[i] * DIMS[i + 1] for i in range(6))
    bytes_accessed = (
        x.size * x.dtype.itemsize
        + w_packed.size * w_packed.dtype.itemsize
        + b_packed.size * b_packed.dtype.itemsize
        + B * (DIMS[3] + F) * 4
    )

    return pl.pallas_call(
        dae_kernel,
        grid=grid,
        in_specs=in_specs,
        out_specs=out_specs,
        out_shape=out_shape,
        compiler_params=pltpu.CompilerParams(
            dimension_semantics=("parallel",)),
        cost_estimate=pl.CostEstimate(
            flops=flops,
            transcendentals=B * F,          # sigmoid on the decoder output
            bytes_accessed=bytes_accessed),
    )(x, w_packed, b_packed)


def dae_forward(x, w_packed, b_packed):
    """PyTorch-oriented entry: x (B, F) f32 -> (encoded (B, 20f), decoded (B, f))."""
    B = x.shape[0]
    n_tc = _tensorcores_per_chip()
    align = CHUNK * n_tc
    Bp = ((B + align - 1) // align) * align
    if Bp != B:
        # Fallback for batches that are not tile-aligned: pad, compute, slice.
        x = jnp.pad(x, ((0, Bp - B), (0, 0)))
    enc, dec = _dae_forward_impl(x, w_packed, b_packed, tb=Bp // n_tc)
    if Bp != B:
        enc, dec = enc[:B], dec[:B]
    return enc, dec


def init_params(key):
    """Deterministic PyTorch-style Linear init: U(-1/sqrt(fan_in), 1/sqrt(fan_in)).

    Weights in torch's native (out, in) orientation, f32; biases (out,), f32.
    """
    params = []
    for i in range(6):
        fan_in, fan_out = DIMS[i], DIMS[i + 1]
        key, kw, kb = jax.random.split(key, 3)
        bound = 1.0 / float(fan_in) ** 0.5
        w = jax.random.uniform(kw, (fan_out, fan_in), jnp.float32, -bound, bound)
        b = jax.random.uniform(kb, (fan_out,), jnp.float32, -bound, bound)
        params.append((w, b))
    return params


def pack_params(params):
    """Pack the 6 Linear layers into one bf16 weight slab ((in,out) blocks stacked along
    rows, lane-padded to 160) and one f32 bias slab (one row per layer, lane-padded)."""
    wp = jnp.zeros((W_ROWS, W_COLS), jnp.bfloat16)
    bp = jnp.zeros((B_ROWS, W_COLS), jnp.float32)
    for i, (w, b) in enumerate(params):
        fan_in, fan_out = DIMS[i], DIMS[i + 1]
        r0 = W_ROW_OFF[i]
        wp = wp.at[r0:r0 + fan_in, 0:fan_out].set(w.T.astype(jnp.bfloat16))
        bp = bp.at[i, 0:fan_out].set(b)
    return wp, bp


def dae_reference(x, params):
    """Plain-JAX reference with the same bf16-matmul / f32-accumulate arithmetic."""
    h = x.astype(jnp.bfloat16)
    enc = None
    y = None
    for i, (w, b) in enumerate(params):
        y = jnp.dot(h, w.T.astype(jnp.bfloat16),
                    preferred_element_type=jnp.float32) + b
        if i == 2:
            enc = y
        h = y.astype(jnp.bfloat16)
    dec = jax.nn.sigmoid(y)
    return enc, dec


if __name__ == "__main__":
    key = jax.random.PRNGKey(0)
    kx, kp = jax.random.split(key)

    B = 512                  # grid=(1,) on single-TC chips, 2 parallel steps on dual-TC
    x = jax.random.uniform(kx, (B, F), jnp.float32)

    params = init_params(kp)
    w_packed, b_packed = pack_params(params)

    encoded, decoded = dae_forward(x, w_packed, b_packed)
    jax.block_until_ready((encoded, decoded))

    enc_ref, dec_ref = dae_reference(x, params)
    assert encoded.shape == (B, DIMS[3]) and decoded.shape == (B, F)
    assert jnp.allclose(encoded, enc_ref, atol=2e-2, rtol=2e-2), \
        float(jnp.max(jnp.abs(encoded - enc_ref)))
    assert jnp.allclose(decoded, dec_ref, atol=2e-2, rtol=2e-2), \
        float(jnp.max(jnp.abs(decoded - dec_ref)))

    print("KERNEL_OK")
</pallas_src>

<mosaic_0001>
module attributes {stable_mosaic.version = 11 : i64} {
  func.func @dae_kernel(%arg0: i32, %arg1: memref<512x8xf32, #tpu.memory_space<vmem>>, %arg2: memref<568x160xbf16, #tpu.memory_space<vmem>>, %arg3: memref<8x160xf32, #tpu.memory_space<vmem>>, %arg4: memref<512x160xf32, #tpu.memory_space<vmem>>, %arg5: memref<512x8xf32, #tpu.memory_space<vmem>>) attributes {dimension_semantics = [#tpu.dimension_semantics<parallel>], iteration_bounds = array<i64: 1>, scalar_prefetch = 0 : i64, scratch_operands = 0 : i64, tpu.core_type = #tpu.core_type<tc>, window_params = [{transform_indices = @transform_0, window_bounds = array<i64: 512, 8>}, {pipeline_mode = #tpu.pipeline_mode<synchronous>, transform_indices = @transform_1, window_bounds = array<i64: 568, 160>}, {pipeline_mode = #tpu.pipeline_mode<synchronous>, transform_indices = @transform_2, window_bounds = array<i64: 8, 160>}, {transform_indices = @transform_3, window_bounds = array<i64: 512, 160>}, {transform_indices = @transform_4, window_bounds = array<i64: 512, 8>}]} {
    %c0_i32 = arith.constant 0 : i32
    %c4_i32 = arith.constant 4 : i32
    %0 = arith.addi %c0_i32, %c4_i32 : i32
    %c1_i32 = arith.constant 1 : i32
    scf.for %arg6 = %c0_i32 to %0 step %c1_i32  : i32 {
      %c128_i32 = arith.constant 128 : i32
      %1 = arith.muli %arg6, %c128_i32 : i32
      %2 = tpu.assume_multiple %1, 128 : i32
      %3 = arith.index_cast %2 : i32 to index
      %c0 = arith.constant 0 : index
      %4 = vector.load %arg1[%3, %c0] : memref<512x8xf32, #tpu.memory_space<vmem>>, vector<128x8xf32>
      %5 = arith.truncf %4 : vector<128x8xf32> to vector<128x8xbf16>
      %c0_1 = arith.constant 0 : index
      %c0_2 = arith.constant 0 : index
      %6 = vector.load %arg2[%c0_1, %c0_2] : memref<568x160xbf16, #tpu.memory_space<vmem>>, vector<8x80xbf16>
      %c0_3 = arith.constant 0 : index
      %c0_4 = arith.constant 0 : index
      %7 = vector.load %arg3[%c0_3, %c0_4] : memref<8x160xf32, #tpu.memory_space<vmem>>, vector<1x80xf32>
      %cst = arith.constant dense<0.000000e+00> : vector<128x80xf32>
      %8 = tpu.matmul %5, %6, %cst {dimension_numbers = #tpu.dot_dimension_numbers<[1], [0], [0], [1], [0, 0, 1, 1], [], []>} : vector<128x8xbf16>, vector<8x80xbf16>, vector<128x80xf32> -> vector<128x80xf32>
      %9 = vector.broadcast %7 : vector<1x80xf32> to vector<128x80xf32>
      %10 = arith.addf %8, %9 : vector<128x80xf32>
      %11 = arith.truncf %10 : vector<128x80xf32> to vector<128x80xbf16>
      %c8 = arith.constant 8 : index
      %c0_5 = arith.constant 0 : index
      %12 = vector.load %arg2[%c8, %c0_5] : memref<568x160xbf16, #tpu.memory_space<vmem>>, vector<80x120xbf16>
      %c1 = arith.constant 1 : index
      %c0_6 = arith.constant 0 : index
      %13 = vector.load %arg3[%c1, %c0_6] : memref<8x160xf32, #tpu.memory_space<vmem>>, vector<1x120xf32>
      %cst_7 = arith.constant dense<0.000000e+00> : vector<128x120xf32>
      %14 = tpu.matmul %11, %12, %cst_7 {dimension_numbers = #tpu.dot_dimension_numbers<[1], [0], [0], [1], [0, 0, 1, 1], [], []>} : vector<128x80xbf16>, vector<80x120xbf16>, vector<128x120xf32> -> vector<128x120xf32>
      %15 = vector.broadcast %13 : vector<1x120xf32> to vector<128x120xf32>
      %16 = arith.addf %14, %15 : vector<128x120xf32>
      %17 = arith.truncf %16 : vector<128x120xf32> to vector<128x120xbf16>
      %c88 = arith.constant 88 : index
      %c0_8 = arith.constant 0 : index
      %18 = vector.load %arg2[%c88, %c0_8] : memref<568x160xbf16, #tpu.memory_space<vmem>>, vector<120x160xbf16>
      %c2 = arith.constant 2 : index
      %c0_9 = arith.constant 0 : index
      %19 = vector.load %arg3[%c2, %c0_9] : memref<8x160xf32, #tpu.memory_space<vmem>>, vector<1x160xf32>
      %cst_10 = arith.constant dense<0.000000e+00> : vector<128x160xf32>
      %20 = tpu.matmul %17, %18, %cst_10 {dimension_numbers = #tpu.dot_dimension_numbers<[1], [0], [0], [1], [0, 0, 1, 1], [], []>} : vector<128x120xbf16>, vector<120x160xbf16>, vector<128x160xf32> -> vector<128x160xf32>
      %21 = vector.broadcast %19 : vector<1x160xf32> to vector<128x160xf32>
      %22 = arith.addf %20, %21 : vector<128x160xf32>
      %23 = arith.index_cast %2 : i32 to index
      %c0_11 = arith.constant 0 : index
      %24 = vector.load %arg4[%23, %c0_11] : memref<512x160xf32, #tpu.memory_space<vmem>>, vector<128x160xf32>
      tpu.vector_store %arg4[%23, %c0_11], %22 {strides = array<i32>} : memref<512x160xf32, #tpu.memory_space<vmem>>, vector<128x160xf32>,
      %25 = arith.truncf %22 : vector<128x160xf32> to vector<128x160xbf16>
      %c208 = arith.constant 208 : index
      %c0_12 = arith.constant 0 : index
      %26 = vector.load %arg2[%c208, %c0_12] : memref<568x160xbf16, #tpu.memory_space<vmem>>, vector<160x120xbf16>
      %c3 = arith.constant 3 : index
      %c0_13 = arith.constant 0 : index
      %27 = vector.load %arg3[%c3, %c0_13] : memref<8x160xf32, #tpu.memory_space<vmem>>, vector<1x120xf32>
      %cst_14 = arith.constant dense<0.000000e+00> : vector<128x120xf32>
      %28 = tpu.matmul %25, %26, %cst_14 {dimension_numbers = #tpu.dot_dimension_numbers<[1], [0], [0], [1], [0, 0, 1, 1], [], []>} : vector<128x160xbf16>, vector<160x120xbf16>, vector<128x120xf32> -> vector<128x120xf32>
      %29 = vector.broadcast %27 : vector<1x120xf32> to vector<128x120xf32>
      %30 = arith.addf %28, %29 : vector<128x120xf32>
      %31 = arith.truncf %30 : vector<128x120xf32> to vector<128x120xbf16>
      %c368 = arith.constant 368 : index
      %c0_15 = arith.constant 0 : index
      %32 = vector.load %arg2[%c368, %c0_15] : memref<568x160xbf16, #tpu.memory_space<vmem>>, vector<120x80xbf16>
      %c4 = arith.constant 4 : index
      %c0_16 = arith.constant 0 : index
      %33 = vector.load %arg3[%c4, %c0_16] : memref<8x160xf32, #tpu.memory_space<vmem>>, vector<1x80xf32>
      %cst_17 = arith.constant dense<0.000000e+00> : vector<128x80xf32>
      %34 = tpu.matmul %31, %32, %cst_17 {dimension_numbers = #tpu.dot_dimension_numbers<[1], [0], [0], [1], [0, 0, 1, 1], [], []>} : vector<128x120xbf16>, vector<120x80xbf16>, vector<128x80xf32> -> vector<128x80xf32>
      %35 = vector.broadcast %33 : vector<1x80xf32> to vector<128x80xf32>
      %36 = arith.addf %34, %35 : vector<128x80xf32>
      %37 = arith.truncf %36 : vector<128x80xf32> to vector<128x80xbf16>
      %c488 = arith.constant 488 : index
      %c0_18 = arith.constant 0 : index
      %38 = vector.load %arg2[%c488, %c0_18] : memref<568x160xbf16, #tpu.memory_space<vmem>>, vector<80x8xbf16>
      %c5 = arith.constant 5 : index
      %c0_19 = arith.constant 0 : index
      %39 = vector.load %arg3[%c5, %c0_19] : memref<8x160xf32, #tpu.memory_space<vmem>>, vector<1x8xf32>
      %cst_20 = arith.constant dense<0.000000e+00> : vector<128x8xf32>
      %40 = tpu.matmul %37, %38, %cst_20 {dimension_numbers = #tpu.dot_dimension_numbers<[1], [0], [0], [1], [0, 0, 1, 1], [], []>} : vector<128x80xbf16>, vector<80x8xbf16>, vector<128x8xf32> -> vector<128x8xf32>
      %41 = vector.broadcast %39 : vector<1x8xf32> to vector<128x8xf32>
      %42 = arith.addf %40, %41 : vector<128x8xf32>
      %43 = arith.negf %42 : vector<128x8xf32>
      %44 = math.exp %43 : vector<128x8xf32>
      %cst_21 = arith.constant 1.000000e+00 : f32
      %45 = vector.broadcast %cst_21 : f32 to vector<128x8xf32>
      %46 = arith.addf %45, %44 : vector<128x8xf32>
      %47 = arith.divf %45, %46 : vector<128x8xf32>
      %48 = arith.index_cast %2 : i32 to index
      %c0_22 = arith.constant 0 : index
      %49 = vector.load %arg5[%48, %c0_22] : memref<512x8xf32, #tpu.memory_space<vmem>>, vector<128x8xf32>
      tpu.vector_store %arg5[%48, %c0_22], %47 {strides = array<i32>} : memref<512x8xf32, #tpu.memory_space<vmem>>, vector<128x8xf32>,
    }
    %c4_i32_0 = arith.constant 4 : i32
    return
  }
  func.func @transform_0(%arg0: i32) -> (i32, i32) {
    %c0_i32 = arith.constant 0 : i32
    %c0_i32_0 = arith.constant 0 : i32
    return %arg0, %c0_i32 : i32, i32
  }
  func.func @transform_1(%arg0: i32) -> (i32, i32) {
    %c0_i32 = arith.constant 0 : i32
    %c0_i32_0 = arith.constant 0 : i32
    %c0_i32_1 = arith.constant 0 : i32
    return %c0_i32, %c0_i32_0 : i32, i32
  }
  func.func @transform_2(%arg0: i32) -> (i32, i32) {
    %c0_i32 = arith.constant 0 : i32
    %c0_i32_0 = arith.constant 0 : i32
    %c0_i32_1 = arith.constant 0 : i32
    return %c0_i32, %c0_i32_0 : i32, i32
  }
  func.func @transform_3(%arg0: i32) -> (i32, i32) {
    %c0_i32 = arith.constant 0 : i32
    %c0_i32_0 = arith.constant 0 : i32
    return %arg0, %c0_i32 : i32, i32
  }
  func.func @transform_4(%arg0: i32) -> (i32, i32) {
    %c0_i32 = arith.constant 0 : i32
    %c0_i32_0 = arith.constant 0 : i32
    return %arg0, %c0_i32 : i32, i32
  }
}

</mosaic_0001>

<llo_original>
// kernel: _dae_forward_impl.1
$region0: #{_dae_forward_impl.1}
  #allocation0 [shape = 'u32[]', space=smem, size = 0x4, offset = 0x4, fixed_abs, tag = 'smem constant byte address 0x4 - core index']
  #allocation1 [shape = 'u32[144,128]{1,0:T(1,128)}', space=vmem, size = 0x12000, scoped, tag = 'internal scratch']
  %s0 = inlined_call_operand.vmem [shape: f32[512,8], index: 0, kind: input, shape index: {}]
  %s1 = inlined_call_operand.vmem [shape: bf16[568,160], index: 1, kind: input, shape index: {}]
  %s2 = inlined_call_operand.vmem [shape: f32[8,160], index: 2, kind: input, shape index: {}]
  %s3 = inlined_call_operand.vmem [shape: f32[512,160], index: 3, kind: output, shape index: {0}]
  %s4 = inlined_call_operand.vmem [shape: f32[512,8], index: 4, kind: output, shape index: {1}]
  %5 = xla_tuple %s3, %s4
  %s6 = sld [smem:[#allocation0]]
  $region37: #{_dae_forward_impl.1} parent=0
    _
  %s8 = ssub.s32 1, %s6
  %s9 = scalar_select 0, %s8, %s6
  // Predicated region
  $region2: #{_dae_forward_impl.1} parent=0 // pred_check
    _
  $region3: #{_dae_forward_impl.1} parent=0 // pred_check_branch
    %11 = sbr.rel (0) target = $region5
  $region4: #{_dae_forward_impl.1} parent=0 // pred_region
    _
  $region5: #{_dae_forward_impl.1} parent=0 // pred_fallthru
    _
  // Predicated region
  $region6: #{_dae_forward_impl.1} parent=0 // pred_check
    _
  $region7: #{_dae_forward_impl.1} parent=0 // pred_check_branch
    %13 = sbr.rel (0) target = $region9
  $region8: #{_dae_forward_impl.1} parent=0 // pred_region
    _
  $region9: #{_dae_forward_impl.1} parent=0 // pred_fallthru
    _
  // Predicated region
  $region10: #{_dae_forward_impl.1} parent=0 // pred_check
    _
  $region11: #{_dae_forward_impl.1} parent=0 // pred_check_branch
    %15 = sbr.rel (0) target = $region13
  $region12: #{_dae_forward_impl.1} parent=0 // pred_region
    _
  $region13: #{_dae_forward_impl.1} parent=0 // pred_fallthru
    _
  loop: start=0, step=1, limit=4
  $region14: #{_dae_forward_impl.1} parent=0 // loop_pre_header
    _
  $region15: #{_dae_forward_impl.1} parent=0 // loop_header
    %s18 = sphi 0, %s22
    %p19 = scmp.ge.s32.totalorder %s18, 4
  $region16: #{_dae_forward_impl.1} parent=0 // loop_header_branch
    %21 = sbr.rel (%p19) target = $region20
  $region17: #{_dae_forward_impl.1} parent=0 // loop_body
    %s23 = smul.u32 %s18, 128
    %s24 = scalar_lea.vmem %s0, %s23
    %v25 = vld [vmem:[%s24] sm:$0xff]
    %v26 = vld [vmem:[%s24 + $0x8] sm:$0xff]
    %v27 = vld [vmem:[%s24 + $0x10] sm:$0xff]
    %v28 = vld [vmem:[%s24 + $0x18] sm:$0xff]
    %v29 = vld [vmem:[%s24 + $0x20] sm:$0xff]
    %v30 = vld [vmem:[%s24 + $0x28] sm:$0xff]
    %v31 = vld [vmem:[%s24 + $0x30] sm:$0xff]
    %v32 = vld [vmem:[%s24 + $0x38] sm:$0xff]
    %v33 = vld [vmem:[%s24 + $0x40] sm:$0xff]
    %v34 = vld [vmem:[%s24 + $0x48] sm:$0xff]
    %v35 = vld [vmem:[%s24 + $0x50] sm:$0xff]
    %v36 = vld [vmem:[%s24 + $0x58] sm:$0xff]
    %v37 = vld [vmem:[%s24 + $0x60] sm:$0xff]
    %v38 = vld [vmem:[%s24 + $0x68] sm:$0xff]
    %v39 = vld [vmem:[%s24 + $0x70] sm:$0xff]
    %v40 = vld [vmem:[%s24 + $0x78] sm:$0xff]
    %v41 = vpack.c.bf16 %v26, %v25
    %v42 = vpack.c.bf16 %v28, %v27
    %v43 = vpack.c.bf16 %v30, %v29
    %v44 = vpack.c.bf16 %v32, %v31
    %v45 = vpack.c.bf16 %v34, %v33
    %v46 = vpack.c.bf16 %v36, %v35
    %v47 = vpack.c.bf16 %v38, %v37
    %v48 = vpack.c.bf16 %v40, %v39
    %v49 = vld [vmem:[%s1] sm:$0xf]
    %v50 = vld [vmem:[%s2] ss:$0 sm:$0xff]
    %vm51 = vcmask 64512
    %v53 = vsel %vm51, %v41, 0
    %v56 = vsel %vm51, %v42, 0
    %v59 = vsel %vm51, %v43, 0
    %v62 = vsel %vm51, %v44, 0
    %v65 = vsel %vm51, %v45, 0
    %v68 = vsel %vm51, %v46, 0
    %v71 = vsel %vm51, %v47, 0
    %v74 = vsel %vm51, %v48, 0
    %vm76 = vcmask 1043456
    %v78 = vsel %vm76, %v49, 0
    %80 = vmatprep.subr.bf16.mxu0 0
    %81 = vmatpush1.bf16.msra.mxu0 0
    %82 = vmatprep.subr.bf16.mxu0 0
    %83 = vmatpush1.bf16.msra.mxu0 0
    %84 = vmatprep.subr.bf16.mxu0 0
    %85 = vmatpush1.bf16.msra.mxu0 0
    %86 = vmatprep.subr.bf16.mxu0 0
    %87 = vmatpush1.bf16.msra.mxu0 0
    %88 = vmatprep.subr.bf16.mxu0 0
    %89 = vmatpush1.bf16.msra.mxu0 0
    %90 = vmatprep.subr.bf16.mxu0 0
    %91 = vmatpush1.bf16.msra.mxu0 0
    %92 = vmatprep.subr.bf16.mxu0 0
    %93 = vmatpush1.bf16.msra.mxu0 0
    %94 = vmatprep.subr.bf16.mxu0 0
    %95 = vmatpush1.bf16.msra.mxu0 %v78
    %96 = vmatprep.subr.bf16.mxu0 0
    %97 = vmatpush2.bf16.msra.mxu0 0
    %98 = vmatprep.subr.bf16.mxu0 0
    %99 = vmatpush2.bf16.msra.mxu0 0
    %100 = vmatprep.subr.bf16.mxu0 0
    %101 = vmatpush2.bf16.msra.mxu0 0
    %102 = vmatprep.subr.bf16.mxu0 0
    %103 = vmatpush2.bf16.msra.mxu0 0
    %104 = vmatprep.subr.bf16.mxu0 0
    %105 = vmatpush2.bf16.msra.mxu0 0
    %106 = vmatprep.subr.bf16.mxu0 0
    %107 = vmatpush2.bf16.msra.mxu0 0
    %108 = vmatprep.subr.bf16.mxu0 0
    %109 = vmatpush2.bf16.msra.mxu0 0
    %110 = vmatprep.subr.bf16.mxu0 0
    %111 = vmatpush2.bf16.msra.mxu0 0
    %112 = vmatprep.mubr.bf16.mxu0 0
    %113 = vmatmul.mubr.bf16.gmra.mxu0 %v53
    %v114 = vpop.f32.mrf.mxu0
    %v115 = vadd.f32 %v50, %v114
    %v116 = vpop.f32.mrf.mxu0
    %v117 = vpop.f32.mrf.mxu0
    %v118 = vadd.f32 %v50, %v117
    %v119 = vpop.f32.mrf.mxu0
    %120 = vmatprep.mubr.bf16.mxu0 0
    %121 = vmatmul.mubr.bf16.gmra.mxu0 %v56
    %v122 = vpop.f32.mrf.mxu0
    %v123 = vadd.f32 %v50, %v122
    %v124 = vpop.f32.mrf.mxu0
    %v125 = vpop.f32.mrf.mxu0
    %v126 = vadd.f32 %v50, %v125
    %v127 = vpop.f32.mrf.mxu0
    %128 = vmatprep.mubr.bf16.mxu0 0
    %129 = vmatmul.mubr.bf16.gmra.mxu0 %v59
    %v130 = vpop.f32.mrf.mxu0
    %v131 = vadd.f32 %v50, %v130
    %v132 = vpop.f32.mrf.mxu0
    %v133 = vpop.f32.mrf.mxu0
    %v134 = vadd.f32 %v50, %v133
    %v135 = vpop.f32.mrf.mxu0
    %136 = vmatprep.mubr.bf16.mxu0 0
    %137 = vmatmul.mubr.bf16.gmra.mxu0 %v62
    %v138 = vpop.f32.mrf.mxu0
    %v139 = vadd.f32 %v50, %v138
    %v140 = vpop.f32.mrf.mxu0
    %v141 = vpop.f32.mrf.mxu0
    %v142 = vadd.f32 %v50, %v141
    %v143 = vpop.f32.mrf.mxu0
    %144 = vmatprep.mubr.bf16.mxu0 0
    %145 = vmatmul.mubr.bf16.gmra.mxu0 %v65
    %v146 = vpop.f32.mrf.mxu0
    %v147 = vadd.f32 %v50, %v146
    %v148 = vpop.f32.mrf.mxu0
    %v149 = vpop.f32.mrf.mxu0
    %v150 = vadd.f32 %v50, %v149
    %v151 = vpop.f32.mrf.mxu0
    %152 = vmatprep.mubr.bf16.mxu0 0
    %153 = vmatmul.mubr.bf16.gmra.mxu0 %v68
    %v154 = vpop.f32.mrf.mxu0
    %v155 = vadd.f32 %v50, %v154
    %v156 = vpop.f32.mrf.mxu0
    %v157 = vpop.f32.mrf.mxu0
    %v158 = vadd.f32 %v50, %v157
    %v159 = vpop.f32.mrf.mxu0
    %160 = vmatprep.mubr.bf16.mxu0 0
    %161 = vmatmul.mubr.bf16.gmra.mxu0 %v71
    %v162 = vpop.f32.mrf.mxu0
    %v163 = vadd.f32 %v50, %v162
    %v164 = vpop.f32.mrf.mxu0
    %v165 = vpop.f32.mrf.mxu0
    %v166 = vadd.f32 %v50, %v165
    %v167 = vpop.f32.mrf.mxu0
    %168 = vmatprep.mubr.bf16.mxu0 0
    %169 = vmatmul.mubr.bf16.gmra.mxu0 %v74
    %v170 = vpop.f32.mrf.mxu0
    %v171 = vadd.f32 %v50, %v170
    %v172 = vpop.f32.mrf.mxu0
    %v173 = vpop.f32.mrf.mxu0
    %v174 = vadd.f32 %v50, %v173
    %v175 = vpop.f32.mrf.mxu0
    %176 = vdwg.mxu0
    %v177 = vpack.c.bf16 %v118, %v115
    %v178 = vpack.c.bf16 %v126, %v123
    %v179 = vpack.c.bf16 %v134, %v131
    %v180 = vpack.c.bf16 %v142, %v139
    %v181 = vpack.c.bf16 %v150, %v147
    %v182 = vpack.c.bf16 %v158, %v155
    %v183 = vpack.c.bf16 %v166, %v163
    %v184 = vpack.c.bf16 %v174, %v171
    %v185 = vld [vmem:[%s1 + $0x8] sm:$0xf]
    %v186 = vld [vmem:[%s1 + $0x10] sm:$0xf]
    %v187 = vld [vmem:[%s1 + $0x18] sm:$0xf]
    %v188 = vld [vmem:[%s1 + $0x20] sm:$0xf]
    %v189 = vld [vmem:[%s1 + $0x28] sm:$0xf]
    %v190 = vld [vmem:[%s1 + $0x30] sm:$0xf]
    %v191 = vld [vmem:[%s1 + $0x38] sm:$0xf]
    %v192 = vld [vmem:[%s1 + $0x40] sm:$0xf]
    %v193 = vld [vmem:[%s1 + $0x48] sm:$0xf]
    %v194 = vld [vmem:[%s1 + $0x50] sm:$0xf]
    %v195 = vld [vmem:[%s2 + $0x1] ss:$0 sm:$0xff]
    %v206 = vunpack.c.l.b16 %v185
    %v207 = vunpack.c.l.b16 %v186
    %v208 = vunpack.c.l.b16 %v187
    %v209 = vunpack.c.l.b16 %v188
    %v210 = vunpack.c.l.b16 %v189
    %v211 = vunpack.c.l.b16 %v190
    %v212 = vunpack.c.l.b16 %v191
    %v213 = vunpack.c.l.b16 %v192
    %v214 = vunpack.c.l.b16 %v193
    %v215 = vunpack.c.l.b16 %v194
    %v216 = vpack.c.b16 %v207, %v206
    %v217 = vpack.c.b16 %v209, %v208
    %v218 = vpack.c.b16 %v211, %v210
    %v219 = vpack.c.b16 %v213, %v212
    %v220 = vpack.c.b16 %v215, %v214
    %vm226 = vcmask 654336
    %v228 = vsel %vm226, %v177, 0
    %v231 = vsel %vm226, %v178, 0
    %v234 = vsel %vm226, %v179, 0
    %v237 = vsel %vm226, %v180, 0
    %v240 = vsel %vm226, %v181, 0
    %v243 = vsel %vm226, %v182, 0
    %v246 = vsel %vm226, %v183, 0
    %v249 = vsel %vm226, %v184, 0
    %251 = vmatprep.subr.bf16.mxu0 0
    %252 = vmatpush1.bf16.msra.mxu0 0
    %253 = vmatprep.subr.bf16.mxu0 0
    %254 = vmatpush1.bf16.msra.mxu0 0
    %255 = vmatprep.subr.bf16.mxu0 0
    %256 = vmatpush1.bf16.msra.mxu0 0
    %257 = vmatprep.subr.bf16.mxu0 0
    %258 = vmatpush1.bf16.msra.mxu0 %v220
    %259 = vmatprep.subr.bf16.mxu0 0
    %260 = vmatpush1.bf16.msra.mxu0 %v219
    %261 = vmatprep.subr.bf16.mxu0 0
    %262 = vmatpush1.bf16.msra.mxu0 %v218
    %263 = vmatprep.subr.bf16.mxu0 0
    %264 = vmatpush1.bf16.msra.mxu0 %v217
    %265 = vmatprep.subr.bf16.mxu0 0
    %266 = vmatpush1.bf16.msra.mxu0 %v216
    %267 = vmatprep.subr.bf16.mxu0 0
    %268 = vmatpush2.bf16.msra.mxu0 0
    %269 = vmatprep.subr.bf16.mxu0 0
    %270 = vmatpush2.bf16.msra.mxu0 0
    %271 = vmatprep.subr.bf16.mxu0 0
    %272 = vmatpush2.bf16.msra.mxu0 0
    %273 = vmatprep.subr.bf16.mxu0 0
    %274 = vmatpush2.bf16.msra.mxu0 0
    %275 = vmatprep.subr.bf16.mxu0 0
    %276 = vmatpush2.bf16.msra.mxu0 0
    %277 = vmatprep.subr.bf16.mxu0 0
    %278 = vmatpush2.bf16.msra.mxu0 0
    %279 = vmatprep.subr.bf16.mxu0 0
    %280 = vmatpush2.bf16.msra.mxu0 0
    %281 = vmatprep.subr.bf16.mxu0 0
    %282 = vmatpush2.bf16.msra.mxu0 0
    %283 = vmatprep.mubr.bf16.mxu0 0
    %284 = vmatmul.mubr.bf16.gmra.mxu0 %v228
    %v285 = vpop.f32.mrf.mxu0
    %v286 = vadd.f32 %v195, %v285
    %v287 = vpop.f32.mrf.mxu0
    %v288 = vpop.f32.mrf.mxu0
    %v289 = vadd.f32 %v195, %v288
    %v290 = vpop.f32.mrf.mxu0
    %291 = vmatprep.mubr.bf16.mxu0 0
    %292 = vmatmul.mubr.bf16.gmra.mxu0 %v231
    %v293 = vpop.f32.mrf.mxu0
    %v294 = vadd.f32 %v195, %v293
    %v295 = vpop.f32.mrf.mxu0
    %v296 = vpop.f32.mrf.mxu0
    %v297 = vadd.f32 %v195, %v296
    %v298 = vpop.f32.mrf.mxu0
    %299 = vmatprep.mubr.bf16.mxu0 0
    %300 = vmatmul.mubr.bf16.gmra.mxu0 %v234
    %v301 = vpop.f32.mrf.mxu0
    %v302 = vadd.f32 %v195, %v301
    %v303 = vpop.f32.mrf.mxu0
    %v304 = vpop.f32.mrf.mxu0
    %v305 = vadd.f32 %v195, %v304
    %v306 = vpop.f32.mrf.mxu0
    %307 = vmatprep.mubr.bf16.mxu0 0
    %308 = vmatmul.mubr.bf16.gmra.mxu0 %v237
    %v309 = vpop.f32.mrf.mxu0
    %v310 = vadd.f32 %v195, %v309
    %v311 = vpop.f32.mrf.mxu0
    %v312 = vpop.f32.mrf.mxu0
    %v313 = vadd.f32 %v195, %v312
    %v314 = vpop.f32.mrf.mxu0
    %315 = vmatprep.mubr.bf16.mxu0 0
    %316 = vmatmul.mubr.bf16.gmra.mxu0 %v240
    %v317 = vpop.f32.mrf.mxu0
    %v318 = vadd.f32 %v195, %v317
    %v319 = vpop.f32.mrf.mxu0
    %v320 = vpop.f32.mrf.mxu0
    %v321 = vadd.f32 %v195, %v320
    %v322 = vpop.f32.mrf.mxu0
    %323 = vmatprep.mubr.bf16.mxu0 0
    %324 = vmatmul.mubr.bf16.gmra.mxu0 %v243
    %v325 = vpop.f32.mrf.mxu0
    %v326 = vadd.f32 %v195, %v325
    %v327 = vpop.f32.mrf.mxu0
    %v328 = vpop.f32.mrf.mxu0
    %v329 = vadd.f32 %v195, %v328
    %v330 = vpop.f32.mrf.mxu0
    %331 = vmatprep.mubr.bf16.mxu0 0
    %332 = vmatmul.mubr.bf16.gmra.mxu0 %v246
    %v333 = vpop.f32.mrf.mxu0
    %v334 = vadd.f32 %v195, %v333
    %v335 = vpop.f32.mrf.mxu0
    %v336 = vpop.f32.mrf.mxu0
    %v337 = vadd.f32 %v195, %v336
    %v338 = vpop.f32.mrf.mxu0
    %339 = vmatprep.mubr.bf16.mxu0 0
    %340 = vmatmul.mubr.bf16.gmra.mxu0 %v249
    %v341 = vpop.f32.mrf.mxu0
    %v342 = vadd.f32 %v195, %v341
    %v343 = vpop.f32.mrf.mxu0
    %v344 = vpop.f32.mrf.mxu0
    %v345 = vadd.f32 %v195, %v344
    %v346 = vpop.f32.mrf.mxu0
    %347 = vdwg.mxu0
    %v348 = vpack.c.bf16 %v289, %v286
    %v349 = vpack.c.bf16 %v297, %v294
    %v350 = vpack.c.bf16 %v305, %v302
    %v351 = vpack.c.bf16 %v313, %v310
    %v352 = vpack.c.bf16 %v321, %v318
    %v353 = vpack.c.bf16 %v329, %v326
    %v354 = vpack.c.bf16 %v337, %v334
    %v355 = vpack.c.bf16 %v345, %v342
    %v356 = vld [vmem:[%s1 + $0x58] sm:$0xff]
    %v357 = vld [vmem:[%s1 + $0x60] sm:$0xff]
    %v358 = vld [vmem:[%s1 + $0x68] sm:$0xff]
    %v359 = vld [vmem:[%s1 + $0x70] sm:$0xff]
    %v360 = vld [vmem:[%s1 + $0x78] sm:$0xff]
    %v361 = vld [vmem:[%s1 + $0x80] sm:$0xff]
    %v362 = vld [vmem:[%s1 + $0x88] sm:$0xff]
    %v363 = vld [vmem:[%s1 + $0x90] sm:$0xff]
    %v364 = vld [vmem:[%s1 + $0x98] sm:$0xff]
    %v365 = vld [vmem:[%s1 + $0xa0] sm:$0xff]
    %v366 = vld [vmem:[%s1 + $0xa8] sm:$0xff]
    %v367 = vld [vmem:[%s1 + $0xb0] sm:$0xff]
    %v368 = vld [vmem:[%s1 + $0xb8] sm:$0xff]
    %v369 = vld [vmem:[%s1 + $0xc0] sm:$0xff]
    %v370 = vld [vmem:[%s1 + $0xc8] sm:$0xff]
    %s371 = scalar_lea.vmem %s2, 2
    %v372 = vld [vmem:[%s371] ss:$8 sm:$0x3]
    %v374 = vlaneseq
    %v375 = vshrl.u32 %v374, 7
    %v376 = vsub.s32 0, %v375
    %v377 = vrot.slane %v372, %v376
    %v378 = vlaneseq
    %v379 = vshrl.u32 %v378, 7
    %v380 = vsub.s32 1, %v379
    %v381 = vrot.slane %v372, %v380
    %v399 = vunpack.c.l.b16 %v356
    %v400 = vunpack.c.h.b16 %v356
    %v401 = vunpack.c.l.b16 %v357
    %v402 = vunpack.c.h.b16 %v357
    %v403 = vunpack.c.l.b16 %v358
    %v404 = vunpack.c.h.b16 %v358
    %v405 = vunpack.c.l.b16 %v359
    %v406 = vunpack.c.h.b16 %v359
    %v407 = vunpack.c.l.b16 %v360
    %v408 = vunpack.c.h.b16 %v360
    %v409 = vunpack.c.l.b16 %v361
    %v410 = vunpack.c.h.b16 %v361
    %v411 = vunpack.c.l.b16 %v362
    %v412 = vunpack.c.h.b16 %v362
    %v413 = vunpack.c.l.b16 %v363
    %v414 = vunpack.c.h.b16 %v363
    %v415 = vunpack.c.l.b16 %v364
    %v416 = vunpack.c.h.b16 %v364
    %v417 = vunpack.c.l.b16 %v365
    %v418 = vunpack.c.h.b16 %v365
    %v419 = vunpack.c.l.b16 %v366
    %v420 = vunpack.c.h.b16 %v366
    %v421 = vunpack.c.l.b16 %v367
    %v422 = vunpack.c.h.b16 %v367
    %v423 = vunpack.c.l.b16 %v368
    %v424 = vunpack.c.h.b16 %v368
    %v425 = vunpack.c.l.b16 %v369
    %v426 = vunpack.c.h.b16 %v369
    %v427 = vunpack.c.l.b16 %v370
    %v428 = vunpack.c.h.b16 %v370
    %v429 = vpack.c.b16 %v401, %v399
    %v430 = vpack.c.b16 %v402, %v400
    %v431 = vpack.c.b16 %v405, %v403
    %v432 = vpack.c.b16 %v406, %v404
    %v433 = vpack.c.b16 %v409, %v407
    %v434 = vpack.c.b16 %v410, %v408
    %v435 = vpack.c.b16 %v413, %v411
    %v436 = vpack.c.b16 %v414, %v412
    %v437 = vpack.c.b16 %v417, %v415
    %v438 = vpack.c.b16 %v418, %v416
    %v439 = vpack.c.b16 %v421, %v419
    %v440 = vpack.c.b16 %v422, %v420
    %v441 = vpack.c.b16 %v425, %v423
    %v442 = vpack.c.b16 %v426, %v424
    %v443 = vpack.c.b16 %v427, %v427
    %v444 = vpack.c.b16 %v428, %v428
    %vm459 = vcmask 982016
    %v461 = vsel %vm459, %v348, 0
    %v464 = vsel %vm459, %v349, 0
    %v467 = vsel %vm459, %v350, 0
    %v470 = vsel %vm459, %v351, 0
    %v473 = vsel %vm459, %v352, 0
    %v476 = vsel %vm459, %v353, 0
    %v479 = vsel %vm459, %v354, 0
    %v482 = vsel %vm459, %v355, 0
    %v485 = vsel %vm76, %v443, 0
    %v488 = vsel %vm76, %v444, 0
    %490 = vmatprep.subr.bf16.mxu0 %v488
    %491 = vmatpush1.bf16.msra.mxu0 %v485
    %492 = vmatprep.subr.bf16.mxu0 %v442
    %493 = vmatpush1.bf16.msra.mxu0 %v441
    %494 = vmatprep.subr.bf16.mxu0 %v440
    %495 = vmatpush1.bf16.msra.mxu0 %v439
    %496 = vmatprep.subr.bf16.mxu0 %v438
    %497 = vmatpush1.bf16.msra.mxu0 %v437
    %498 = vmatprep.subr.bf16.mxu0 %v436
    %499 = vmatpush1.bf16.msra.mxu0 %v435
    %500 = vmatprep.subr.bf16.mxu0 %v434
    %501 = vmatpush1.bf16.msra.mxu0 %v433
    %502 = vmatprep.subr.bf16.mxu0 %v432
    %503 = vmatpush1.bf16.msra.mxu0 %v431
    %504 = vmatprep.subr.bf16.mxu0 %v430
    %505 = vmatpush1.bf16.msra.mxu0 %v429
    %506 = vmatprep.subr.bf16.mxu0 0
    %507 = vmatpush2.bf16.msra.mxu0 0
    %508 = vmatprep.subr.bf16.mxu0 0
    %509 = vmatpush2.bf16.msra.mxu0 0
    %510 = vmatprep.subr.bf16.mxu0 0
    %511 = vmatpush2.bf16.msra.mxu0 0
    %512 = vmatprep.subr.bf16.mxu0 0
    %513 = vmatpush2.bf16.msra.mxu0 0
    %514 = vmatprep.subr.bf16.mxu0 0
    %515 = vmatpush2.bf16.msra.mxu0 0
    %516 = vmatprep.subr.bf16.mxu0 0
    %517 = vmatpush2.bf16.msra.mxu0 0
    %518 = vmatprep.subr.bf16.mxu0 0
    %519 = vmatpush2.bf16.msra.mxu0 0
    %520 = vmatprep.subr.bf16.mxu0 0
    %521 = vmatpush2.bf16.msra.mxu0 0
    %522 = vmatprep.mubr.bf16.mxu0 0
    %523 = vmatmul.mubr.bf16.gmra.mxu0 %v461
    %v524 = vpop.f32.mrf.mxu0
    %v525 = vadd.f32 %v377, %v524
    %v526 = vpop.f32.mrf.mxu0
    %v527 = vadd.f32 %v381, %v526
    %v528 = vpop.f32.mrf.mxu0
    %v529 = vadd.f32 %v377, %v528
    %v530 = vpop.f32.mrf.mxu0
    %v531 = vadd.f32 %v381, %v530
    %532 = vmatprep.mubr.bf16.mxu0 0
    %533 = vmatmul.mubr.bf16.gmra.mxu0 %v464
    %v534 = vpop.f32.mrf.mxu0
    %v535 = vadd.f32 %v377, %v534
    %v536 = vpop.f32.mrf.mxu0
    %v537 = vadd.f32 %v381, %v536
    %v538 = vpop.f32.mrf.mxu0
    %v539 = vadd.f32 %v377, %v538
    %v540 = vpop.f32.mrf.mxu0
    %v541 = vadd.f32 %v381, %v540
    %542 = vmatprep.mubr.bf16.mxu0 0
    %543 = vmatmul.mubr.bf16.gmra.mxu0 %v467
    %v544 = vpop.f32.mrf.mxu0
    %v545 = vadd.f32 %v377, %v544
    %v546 = vpop.f32.mrf.mxu0
    %v547 = vadd.f32 %v381, %v546
    %v548 = vpop.f32.mrf.mxu0
    %v549 = vadd.f32 %v377, %v548
    %v550 = vpop.f32.mrf.mxu0
    %v551 = vadd.f32 %v381, %v550
    %552 = vmatprep.mubr.bf16.mxu0 0
    %553 = vmatmul.mubr.bf16.gmra.mxu0 %v470
    %v554 = vpop.f32.mrf.mxu0
    %v555 = vadd.f32 %v377, %v554
    %v556 = vpop.f32.mrf.mxu0
    %v557 = vadd.f32 %v381, %v556
    %v558 = vpop.f32.mrf.mxu0
    %v559 = vadd.f32 %v377, %v558
    %v560 = vpop.f32.mrf.mxu0
    %v561 = vadd.f32 %v381, %v560
    %562 = vmatprep.mubr.bf16.mxu0 0
    %563 = vmatmul.mubr.bf16.gmra.mxu0 %v473
    %v564 = vpop.f32.mrf.mxu0
    %v565 = vadd.f32 %v377, %v564
    %v566 = vpop.f32.mrf.mxu0
    %v567 = vadd.f32 %v381, %v566
    %v568 = vpop.f32.mrf.mxu0
    %v569 = vadd.f32 %v377, %v568
    %v570 = vpop.f32.mrf.mxu0
    %v571 = vadd.f32 %v381, %v570
    %572 = vmatprep.mubr.bf16.mxu0 0
    %573 = vmatmul.mubr.bf16.gmra.mxu0 %v476
    %v574 = vpop.f32.mrf.mxu0
    %v575 = vadd.f32 %v377, %v574
    %v576 = vpop.f32.mrf.mxu0
    %v577 = vadd.f32 %v381, %v576
    %v578 = vpop.f32.mrf.mxu0
    %v579 = vadd.f32 %v377, %v578
    %v580 = vpop.f32.mrf.mxu0
    %v581 = vadd.f32 %v381, %v580
    %582 = vmatprep.mubr.bf16.mxu0 0
    %583 = vmatmul.mubr.bf16.gmra.mxu0 %v479
    %v584 = vpop.f32.mrf.mxu0
    %v585 = vadd.f32 %v377, %v584
    %v586 = vpop.f32.mrf.mxu0
    %v587 = vadd.f32 %v381, %v586
    %v588 = vpop.f32.mrf.mxu0
    %v589 = vadd.f32 %v377, %v588
    %v590 = vpop.f32.mrf.mxu0
    %v591 = vadd.f32 %v381, %v590
    %592 = vmatprep.mubr.bf16.mxu0 0
    %593 = vmatmul.mubr.bf16.gmra.mxu0 %v482
    %v594 = vpop.f32.mrf.mxu0
    %v595 = vadd.f32 %v377, %v594
    %v596 = vpop.f32.mrf.mxu0
    %v597 = vadd.f32 %v381, %v596
    %v598 = vpop.f32.mrf.mxu0
    %v599 = vadd.f32 %v377, %v598
    %v600 = vpop.f32.mrf.mxu0
    %v601 = vadd.f32 %v381, %v600
    %602 = vdwg.mxu0
    %s603 = sshra.s32 %s23, 3
    %s604 = sand.u32 %s23, 7
    %s605 = smul.u32 %s603, 2
    %s606 = smul.addr %s605, 8
    %s607 = scalar_lea.vmem %s3, %s606
    %608 = vst [vmem:[%s607] sm:$0xff] %v525
    %vm609 = vcmask 261120
    %610 = vst.msk [vmem:[%s607 + $0x8] sm:$0xff] %vm609, %v527
    %611 = vst [vmem:[%s607 + $0x10] sm:$0xff] %v529
    %612 = vst.msk [vmem:[%s607 + $0x18] sm:$0xff] %vm609, %v531
    %613 = vst [vmem:[%s607 + $0x20] sm:$0xff] %v535
    %614 = vst.msk [vmem:[%s607 + $0x28] sm:$0xff] %vm609, %v537
    %615 = vst [vmem:[%s607 + $0x30] sm:$0xff] %v539
    %616 = vst.msk [vmem:[%s607 + $0x38] sm:$0xff] %vm609, %v541
    %617 = vst [vmem:[%s607 + $0x40] sm:$0xff] %v545
    %618 = vst.msk [vmem:[%s607 + $0x48] sm:$0xff] %vm609, %v547
    %619 = vst [vmem:[%s607 + $0x50] sm:$0xff] %v549
    %620 = vst.msk [vmem:[%s607 + $0x58] sm:$0xff] %vm609, %v551
    %621 = vst [vmem:[%s607 + $0x60] sm:$0xff] %v555
    %622 = vst.msk [vmem:[%s607 + $0x68] sm:$0xff] %vm609, %v557
    %623 = vst [vmem:[%s607 + $0x70] sm:$0xff] %v559
    %624 = vst.msk [vmem:[%s607 + $0x78] sm:$0xff] %vm609, %v561
    %625 = vst [vmem:[%s607 + $0x80] sm:$0xff] %v565
    %626 = vst.msk [vmem:[%s607 + $0x88] sm:$0xff] %vm609, %v567
    %627 = vst [vmem:[%s607 + $0x90] sm:$0xff] %v569
    %628 = vst.msk [vmem:[%s607 + $0x98] sm:$0xff] %vm609, %v571
    %629 = vst [vmem:[%s607 + $0xa0] sm:$0xff] %v575
    %630 = vst.msk [vmem:[%s607 + $0xa8] sm:$0xff] %vm609, %v577
    %631 = vst [vmem:[%s607 + $0xb0] sm:$0xff] %v579
    %632 = vst.msk [vmem:[%s607 + $0xb8] sm:$0xff] %vm609, %v581
    %633 = vst [vmem:[%s607 + $0xc0] sm:$0xff] %v585
    %634 = vst.msk [vmem:[%s607 + $0xc8] sm:$0xff] %vm609, %v587
    %635 = vst [vmem:[%s607 + $0xd0] sm:$0xff] %v589
    %636 = vst.msk [vmem:[%s607 + $0xd8] sm:$0xff] %vm609, %v591
    %637 = vst [vmem:[%s607 + $0xe0] sm:$0xff] %v595
    %638 = vst.msk [vmem:[%s607 + $0xe8] sm:$0xff] %vm609, %v597
    %639 = vst [vmem:[%s607 + $0xf0] sm:$0xff] %v599
    %640 = vst.msk [vmem:[%s607 + $0xf8] sm:$0xff] %vm609, %v601
    %v641 = vpack.c.bf16 %v529, %v525
    %v642 = vpack.c.bf16 %v531, %v527
    %v643 = vpack.c.bf16 %v539, %v535
    %v644 = vpack.c.bf16 %v541, %v537
    %v645 = vpack.c.bf16 %v549, %v545
    %v646 = vpack.c.bf16 %v551, %v547
    %v647 = vpack.c.bf16 %v559, %v555
    %v648 = vpack.c.bf16 %v561, %v557
    %v649 = vpack.c.bf16 %v569, %v565
    %v650 = vpack.c.bf16 %v571, %v567
    %v651 = vpack.c.bf16 %v579, %v575
    %v652 = vpack.c.bf16 %v581, %v577
    %v653 = vpack.c.bf16 %v589, %v585
    %v654 = vpack.c.bf16 %v591, %v587
    %v655 = vpack.c.bf16 %v599, %v595
    %v656 = vpack.c.bf16 %v601, %v597
    %v657 = vld [vmem:[%s1 + $0xd0] sm:$0xf]
    %v658 = vld [vmem:[%s1 + $0xd8] sm:$0xf]
    %v659 = vld [vmem:[%s1 + $0xe0] sm:$0xf]
    %v660 = vld [vmem:[%s1 + $0xe8] sm:$0xf]
    %v661 = vld [vmem:[%s1 + $0xf0] sm:$0xf]
    %v662 = vld [vmem:[%s1 + $0xf8] sm:$0xf]
    %v663 = vld [vmem:[%s1 + $0x100] sm:$0xf]
    %v664 = vld [vmem:[%s1 + $0x108] sm:$0xf]
    %v665 = vld [vmem:[%s1 + $0x110] sm:$0xf]
    %v666 = vld [vmem:[%s1 + $0x118] sm:$0xf]
    %v667 = vld [vmem:[%s1 + $0x120] sm:$0xf]
    %v668 = vld [vmem:[%s1 + $0x128] sm:$0xf]
    %v669 = vld [vmem:[%s1 + $0x130] sm:$0xf]
    %v670 = vld [vmem:[%s1 + $0x138] sm:$0xf]
    %v671 = vld [vmem:[%s1 + $0x140] sm:$0xf]
    %v672 = vld [vmem:[%s1 + $0x148] sm:$0xf]
    %v673 = vld [vmem:[%s1 + $0x150] sm:$0xf]
    %v674 = vld [vmem:[%s1 + $0x158] sm:$0xf]
    %v675 = vld [vmem:[%s1 + $0x160] sm:$0xf]
    %v676 = vld [vmem:[%s1 + $0x168] sm:$0xf]
    %v677 = vld [vmem:[%s2 + $0x3] ss:$0 sm:$0xff]
    %v698 = vunpack.c.l.b16 %v657
    %v699 = vunpack.c.l.b16 %v658
    %v700 = vunpack.c.l.b16 %v659
    %v701 = vunpack.c.l.b16 %v660
    %v702 = vunpack.c.l.b16 %v661
    %v703 = vunpack.c.l.b16 %v662
    %v704 = vunpack.c.l.b16 %v663
    %v705 = vunpack.c.l.b16 %v664
    %v706 = vunpack.c.l.b16 %v665
    %v707 = vunpack.c.l.b16 %v666
    %v708 = vunpack.c.l.b16 %v667
    %v709 = vunpack.c.l.b16 %v668
    %v710 = vunpack.c.l.b16 %v669
    %v711 = vunpack.c.l.b16 %v670
    %v712 = vunpack.c.l.b16 %v671
    %v713 = vunpack.c.l.b16 %v672
    %v714 = vunpack.c.l.b16 %v673
    %v715 = vunpack.c.l.b16 %v674
    %v716 = vunpack.c.l.b16 %v675
    %v717 = vunpack.c.l.b16 %v676
    %v718 = vpack.c.b16 %v699, %v698
    %v719 = vpack.c.b16 %v701, %v700
    %v720 = vpack.c.b16 %v703, %v702
    %v721 = vpack.c.b16 %v705, %v704
    %v722 = vpack.c.b16 %v707, %v706
    %v723 = vpack.c.b16 %v709, %v708
    %v724 = vpack.c.b16 %v711, %v710
    %v725 = vpack.c.b16 %v713, %v712
    %v726 = vpack.c.b16 %v715, %v714
    %v727 = vpack.c.b16 %v717, %v716
    %v739 = vsel %vm609, %v642, 0
    %v742 = vsel %vm609, %v644, 0
    %v745 = vsel %vm609, %v646, 0
    %v748 = vsel %vm609, %v648, 0
    %v751 = vsel %vm609, %v650, 0
    %v754 = vsel %vm609, %v652, 0
    %v757 = vsel %vm609, %v654, 0
    %v760 = vsel %vm609, %v656, 0
    %762 = vmatprep.subr.bf16.mxu0 0
    %763 = vmatpush1.bf16.msra.mxu0 %v725
    %764 = vmatprep.subr.bf16.mxu0 0
    %765 = vmatpush1.bf16.msra.mxu0 %v724
    %766 = vmatprep.subr.bf16.mxu0 0
    %767 = vmatpush1.bf16.msra.mxu0 %v723
    %768 = vmatprep.subr.bf16.mxu0 0
    %769 = vmatpush1.bf16.msra.mxu0 %v722
    %770 = vmatprep.subr.bf16.mxu0 0
    %771 = vmatpush1.bf16.msra.mxu0 %v721
    %772 = vmatprep.subr.bf16.mxu0 0
    %773 = vmatpush1.bf16.msra.mxu0 %v720
    %774 = vmatprep.subr.bf16.mxu0 0
    %775 = vmatpush1.bf16.msra.mxu0 %v719
    %776 = vmatprep.subr.bf16.mxu0 0
    %777 = vmatpush1.bf16.msra.mxu0 %v718
    %778 = vmatprep.subr.bf16.mxu0 0
    %779 = vmatpush2.bf16.msra.mxu0 0
    %780 = vmatprep.subr.bf16.mxu0 0
    %781 = vmatpush2.bf16.msra.mxu0 0
    %782 = vmatprep.subr.bf16.mxu0 0
    %783 = vmatpush2.bf16.msra.mxu0 0
    %784 = vmatprep.subr.bf16.mxu0 0
    %785 = vmatpush2.bf16.msra.mxu0 0
    %786 = vmatprep.subr.bf16.mxu0 0
    %787 = vmatpush2.bf16.msra.mxu0 0
    %788 = vmatprep.subr.bf16.mxu0 0
    %789 = vmatpush2.bf16.msra.mxu0 0
    %790 = vmatprep.subr.bf16.mxu0 0
    %791 = vmatpush2.bf16.msra.mxu0 %v727
    %792 = vmatprep.subr.bf16.mxu0 0
    %793 = vmatpush2.bf16.msra.mxu0 %v726
    %794 = vmatprep.mubr.bf16.mxu0 %v739
    %795 = vmatmul.mubr.bf16.gmra.mxu0 %v641
    %v796 = vpop.f32.mrf.mxu0
    %v797 = vadd.f32 %v677, %v796
    %v798 = vpop.f32.mrf.mxu0
    %v799 = vpop.f32.mrf.mxu0
    %v800 = vadd.f32 %v677, %v799
    %v801 = vpop.f32.mrf.mxu0
    %802 = vmatprep.mubr.bf16.mxu0 %v742
    %803 = vmatmul.mubr.bf16.gmra.mxu0 %v643
    %v804 = vpop.f32.mrf.mxu0
    %v805 = vadd.f32 %v677, %v804
    %v806 = vpop.f32.mrf.mxu0
    %v807 = vpop.f32.mrf.mxu0
    %v808 = vadd.f32 %v677, %v807
    %v809 = vpop.f32.mrf.mxu0
    %810 = vmatprep.mubr.bf16.mxu0 %v745
    %811 = vmatmul.mubr.bf16.gmra.mxu0 %v645
    %v812 = vpop.f32.mrf.mxu0
    %v813 = vadd.f32 %v677, %v812
    %v814 = vpop.f32.mrf.mxu0
    %v815 = vpop.f32.mrf.mxu0
    %v816 = vadd.f32 %v677, %v815
    %v817 = vpop.f32.mrf.mxu0
    %818 = vmatprep.mubr.bf16.mxu0 %v748
    %819 = vmatmul.mubr.bf16.gmra.mxu0 %v647
    %v820 = vpop.f32.mrf.mxu0
    %v821 = vadd.f32 %v677, %v820
    %v822 = vpop.f32.mrf.mxu0
    %v823 = vpop.f32.mrf.mxu0
    %v824 = vadd.f32 %v677, %v823
    %v825 = vpop.f32.mrf.mxu0
    %826 = vmatprep.mubr.bf16.mxu0 %v751
    %827 = vmatmul.mubr.bf16.gmra.mxu0 %v649
    %v828 = vpop.f32.mrf.mxu0
    %v829 = vadd.f32 %v677, %v828
    %v830 = vpop.f32.mrf.mxu0
    %v831 = vpop.f32.mrf.mxu0
    %v832 = vadd.f32 %v677, %v831
    %v833 = vpop.f32.mrf.mxu0
    %834 = vmatprep.mubr.bf16.mxu0 %v754
    %835 = vmatmul.mubr.bf16.gmra.mxu0 %v651
    %v836 = vpop.f32.mrf.mxu0
    %v837 = vadd.f32 %v677, %v836
    %v838 = vpop.f32.mrf.mxu0
    %v839 = vpop.f32.mrf.mxu0
    %v840 = vadd.f32 %v677, %v839
    %v841 = vpop.f32.mrf.mxu0
    %842 = vmatprep.mubr.bf16.mxu0 %v757
    %843 = vmatmul.mubr.bf16.gmra.mxu0 %v653
    %v844 = vpop.f32.mrf.mxu0
    %v845 = vadd.f32 %v677, %v844
    %v846 = vpop.f32.mrf.mxu0
    %v847 = vpop.f32.mrf.mxu0
    %v848 = vadd.f32 %v677, %v847
    %v849 = vpop.f32.mrf.mxu0
    %850 = vmatprep.mubr.bf16.mxu0 %v760
    %851 = vmatmul.mubr.bf16.gmra.mxu0 %v655
    %v852 = vpop.f32.mrf.mxu0
    %v853 = vadd.f32 %v677, %v852
    %v854 = vpop.f32.mrf.mxu0
    %v855 = vpop.f32.mrf.mxu0
    %v856 = vadd.f32 %v677, %v855
    %v857 = vpop.f32.mrf.mxu0
    %858 = vdwg.mxu0
    %v859 = vpack.c.bf16 %v800, %v797
    %v860 = vpack.c.bf16 %v808, %v805
    %v861 = vpack.c.bf16 %v816, %v813
    %v862 = vpack.c.bf16 %v824, %v821
    %v863 = vpack.c.bf16 %v832, %v829
    %v864 = vpack.c.bf16 %v840, %v837
    %v865 = vpack.c.bf16 %v848, %v845
    %v866 = vpack.c.bf16 %v856, %v853
    %v867 = vld [vmem:[%s1 + $0x170] sm:$0xf]
    %v868 = vld [vmem:[%s1 + $0x178] sm:$0xf]
    %v869 = vld [vmem:[%s1 + $0x180] sm:$0xf]
    %v870 = vld [vmem:[%s1 + $0x188] sm:$0xf]
    %v871 = vld [vmem:[%s1 + $0x190] sm:$0xf]
    %v872 = vld [vmem:[%s1 + $0x198] sm:$0xf]
    %v873 = vld [vmem:[%s1 + $0x1a0] sm:$0xf]
    %v874 = vld [vmem:[%s1 + $0x1a8] sm:$0xf]
    %v875 = vld [vmem:[%s1 + $0x1b0] sm:$0xf]
    %v876 = vld [vmem:[%s1 + $0x1b8] sm:$0xf]
    %v877 = vld [vmem:[%s1 + $0x1c0] sm:$0xf]
    %v878 = vld [vmem:[%s1 + $0x1c8] sm:$0xf]
    %v879 = vld [vmem:[%s1 + $0x1d0] sm:$0xf]
    %v880 = vld [vmem:[%s1 + $0x1d8] sm:$0xf]
    %v881 = vld [vmem:[%s1 + $0x1e0] sm:$0xf]
    %v882 = vld [vmem:[%s2 + $0x4] ss:$0 sm:$0xff]
    %v898 = vunpack.c.l.b16 %v867
    %v899 = vunpack.c.l.b16 %v868
    %v900 = vunpack.c.l.b16 %v869
    %v901 = vunpack.c.l.b16 %v870
    %v902 = vunpack.c.l.b16 %v871
    %v903 = vunpack.c.l.b16 %v872
    %v904 = vunpack.c.l.b16 %v873
    %v905 = vunpack.c.l.b16 %v874
    %v906 = vunpack.c.l.b16 %v875
    %v907 = vunpack.c.l.b16 %v876
    %v908 = vunpack.c.l.b16 %v877
    %v909 = vunpack.c.l.b16 %v878
    %v910 = vunpack.c.l.b16 %v879
    %v911 = vunpack.c.l.b16 %v880
    %v912 = vunpack.c.l.b16 %v881
    %v913 = vpack.c.b16 %v899, %v898
    %v914 = vpack.c.b16 %v901, %v900
    %v915 = vpack.c.b16 %v903, %v902
    %v916 = vpack.c.b16 %v905, %v904
    %v917 = vpack.c.b16 %v907, %v906
    %v918 = vpack.c.b16 %v909, %v908
    %v919 = vpack.c.b16 %v911, %v910
    %v920 = vpack.c.b16 %v912, %v912
    %v929 = vsel %vm459, %v859, 0
    %v932 = vsel %vm459, %v860, 0
    %v935 = vsel %vm459, %v861, 0
    %v938 = vsel %vm459, %v862, 0
    %v941 = vsel %vm459, %v863, 0
    %v944 = vsel %vm459, %v864, 0
    %v947 = vsel %vm459, %v865, 0
    %v950 = vsel %vm459, %v866, 0
    %v953 = vsel %vm76, %v920, 0
    %955 = vmatprep.subr.bf16.mxu0 0
    %956 = vmatpush1.bf16.msra.mxu0 %v953
    %957 = vmatprep.subr.bf16.mxu0 0
    %958 = vmatpush1.bf16.msra.mxu0 %v919
    %959 = vmatprep.subr.bf16.mxu0 0
    %960 = vmatpush1.bf16.msra.mxu0 %v918
    %961 = vmatprep.subr.bf16.mxu0 0
    %962 = vmatpush1.bf16.msra.mxu0 %v917
    %963 = vmatprep.subr.bf16.mxu0 0
    %964 = vmatpush1.bf16.msra.mxu0 %v916
    %965 = vmatprep.subr.bf16.mxu0 0
    %966 = vmatpush1.bf16.msra.mxu0 %v915
    %967 = vmatprep.subr.bf16.mxu0 0
    %968 = vmatpush1.bf16.msra.mxu0 %v914
    %969 = vmatprep.subr.bf16.mxu0 0
    %970 = vmatpush1.bf16.msra.mxu0 %v913
    %971 = vmatprep.subr.bf16.mxu0 0
    %972 = vmatpush2.bf16.msra.mxu0 0
    %973 = vmatprep.subr.bf16.mxu0 0
    %974 = vmatpush2.bf16.msra.mxu0 0
    %975 = vmatprep.subr.bf16.mxu0 0
    %976 = vmatpush2.bf16.msra.mxu0 0
    %977 = vmatprep.subr.bf16.mxu0 0
    %978 = vmatpush2.bf16.msra.mxu0 0
    %979 = vmatprep.subr.bf16.mxu0 0
    %980 = vmatpush2.bf16.msra.mxu0 0
    %981 = vmatprep.subr.bf16.mxu0 0
    %982 = vmatpush2.bf16.msra.mxu0 0
    %983 = vmatprep.subr.bf16.mxu0 0
    %984 = vmatpush2.bf16.msra.mxu0 0
    %985 = vmatprep.subr.bf16.mxu0 0
    %986 = vmatpush2.bf16.msra.mxu0 0
    %987 = vmatprep.mubr.bf16.mxu0 0
    %988 = vmatmul.mubr.bf16.gmra.mxu0 %v929
    %v989 = vpop.f32.mrf.mxu0
    %v990 = vadd.f32 %v882, %v989
    %v991 = vpop.f32.mrf.mxu0
    %v992 = vpop.f32.mrf.mxu0
    %v993 = vadd.f32 %v882, %v992
    %v994 = vpop.f32.mrf.mxu0
    %995 = vmatprep.mubr.bf16.mxu0 0
    %996 = vmatmul.mubr.bf16.gmra.mxu0 %v932
    %v997 = vpop.f32.mrf.mxu0
    %v998 = vadd.f32 %v882, %v997
    %v999 = vpop.f32.mrf.mxu0
    %v1000 = vpop.f32.mrf.mxu0
    %v1001 = vadd.f32 %v882, %v1000
    %v1002 = vpop.f32.mrf.mxu0
    %1003 = vmatprep.mubr.bf16.mxu0 0
    %1004 = vmatmul.mubr.bf16.gmra.mxu0 %v935
    %v1005 = vpop.f32.mrf.mxu0
    %v1006 = vadd.f32 %v882, %v1005
    %v1007 = vpop.f32.mrf.mxu0
    %v1008 = vpop.f32.mrf.mxu0
    %v1009 = vadd.f32 %v882, %v1008
    %v1010 = vpop.f32.mrf.mxu0
    %1011 = vmatprep.mubr.bf16.mxu0 0
    %1012 = vmatmul.mubr.bf16.gmra.mxu0 %v938
    %v1013 = vpop.f32.mrf.mxu0
    %v1014 = vadd.f32 %v882, %v1013
    %v1015 = vpop.f32.mrf.mxu0
    %v1016 = vpop.f32.mrf.mxu0
    %v1017 = vadd.f32 %v882, %v1016
    %v1018 = vpop.f32.mrf.mxu0
    %1019 = vmatprep.mubr.bf16.mxu0 0
    %1020 = vmatmul.mubr.bf16.gmra.mxu0 %v941
    %v1021 = vpop.f32.mrf.mxu0
    %v1022 = vadd.f32 %v882, %v1021
    %v1023 = vpop.f32.mrf.mxu0
    %v1024 = vpop.f32.mrf.mxu0
    %v1025 = vadd.f32 %v882, %v1024
    %v1026 = vpop.f32.mrf.mxu0
    %1027 = vmatprep.mubr.bf16.mxu0 0
    %1028 = vmatmul.mubr.bf16.gmra.mxu0 %v944
    %v1029 = vpop.f32.mrf.mxu0
    %v1030 = vadd.f32 %v882, %v1029
    %v1031 = vpop.f32.mrf.mxu0
    %v1032 = vpop.f32.mrf.mxu0
    %v1033 = vadd.f32 %v882, %v1032
    %v1034 = vpop.f32.mrf.mxu0
    %1035 = vmatprep.mubr.bf16.mxu0 0
    %1036 = vmatmul.mubr.bf16.gmra.mxu0 %v947
    %v1037 = vpop.f32.mrf.mxu0
    %v1038 = vadd.f32 %v882, %v1037
    %v1039 = vpop.f32.mrf.mxu0
    %v1040 = vpop.f32.mrf.mxu0
    %v1041 = vadd.f32 %v882, %v1040
    %v1042 = vpop.f32.mrf.mxu0
    %1043 = vmatprep.mubr.bf16.mxu0 0
    %1044 = vmatmul.mubr.bf16.gmra.mxu0 %v950
    %v1045 = vpop.f32.mrf.mxu0
    %v1046 = vadd.f32 %v882, %v1045
    %v1047 = vpop.f32.mrf.mxu0
    %v1048 = vpop.f32.mrf.mxu0
    %v1049 = vadd.f32 %v882, %v1048
    %v1050 = vpop.f32.mrf.mxu0
    %1051 = vdwg.mxu0
    %v1052 = vpack.c.bf16 %v993, %v990
    %v1053 = vpack.c.bf16 %v1001, %v998
    %v1054 = vpack.c.bf16 %v1009, %v1006
    %v1055 = vpack.c.bf16 %v1017, %v1014
    %v1056 = vpack.c.bf16 %v1025, %v1022
    %v1057 = vpack.c.bf16 %v1033, %v1030
    %v1058 = vpack.c.bf16 %v1041, %v1038
    %v1059 = vpack.c.bf16 %v1049, %v1046
    %v1060 = vld [vmem:[%s1 + $0x1e8] sm:$0xf]
    %v1061 = vld [vmem:[%s1 + $0x1f0] sm:$0xf]
    %v1062 = vld [vmem:[%s1 + $0x1f8] sm:$0xf]
    %v1063 = vld [vmem:[%s1 + $0x200] sm:$0xf]
    %v1064 = vld [vmem:[%s1 + $0x208] sm:$0xf]
    %v1065 = vld [vmem:[%s1 + $0x210] sm:$0xf]
    %v1066 = vld [vmem:[%s1 + $0x218] sm:$0xf]
    %v1067 = vld [vmem:[%s1 + $0x220] sm:$0xf]
    %v1068 = vld [vmem:[%s1 + $0x228] sm:$0xf]
    %v1069 = vld [vmem:[%s1 + $0x230] sm:$0xf]
    %v1070 = vld [vmem:[%s2 + $0x5] ss:$0 sm:$0xff]
    %v1081 = vunpack.c.l.b16 %v1060
    %v1082 = vunpack.c.l.b16 %v1061
    %v1083 = vunpack.c.l.b16 %v1062
    %v1084 = vunpack.c.l.b16 %v1063
    %v1085 = vunpack.c.l.b16 %v1064
    %v1086 = vunpack.c.l.b16 %v1065
    %v1087 = vunpack.c.l.b16 %v1066
    %v1088 = vunpack.c.l.b16 %v1067
    %v1089 = vunpack.c.l.b16 %v1068
    %v1090 = vunpack.c.l.b16 %v1069
    %v1091 = vpack.c.b16 %v1082, %v1081
    %v1092 = vpack.c.b16 %v1084, %v1083
    %v1093 = vpack.c.b16 %v1086, %v1085
    %v1094 = vpack.c.b16 %v1088, %v1087
    %v1095 = vpack.c.b16 %v1090, %v1089
    %v1102 = vsel %vm226, %v1052, 0
    %v1105 = vsel %vm226, %v1053, 0
    %v1108 = vsel %vm226, %v1054, 0
    %v1111 = vsel %vm226, %v1055, 0
    %v1114 = vsel %vm226, %v1056, 0
    %v1117 = vsel %vm226, %v1057, 0
    %v1120 = vsel %vm226, %v1058, 0
    %v1123 = vsel %vm226, %v1059, 0
    %1125 = vmatprep.subr.bf16.mxu0 0
    %1126 = vmatpush1.bf16.msra.mxu0 0
    %1127 = vmatprep.subr.bf16.mxu0 0
    %1128 = vmatpush1.bf16.msra.mxu0 0
    %1129 = vmatprep.subr.bf16.mxu0 0
    %1130 = vmatpush1.bf16.msra.mxu0 0
    %1131 = vmatprep.subr.bf16.mxu0 0
    %1132 = vmatpush1.bf16.msra.mxu0 %v1095
    %1133 = vmatprep.subr.bf16.mxu0 0
    %1134 = vmatpush1.bf16.msra.mxu0 %v1094
    %1135 = vmatprep.subr.bf16.mxu0 0
    %1136 = vmatpush1.bf16.msra.mxu0 %v1093
    %1137 = vmatprep.subr.bf16.mxu0 0
    %1138 = vmatpush1.bf16.msra.mxu0 %v1092
    %1139 = vmatprep.subr.bf16.mxu0 0
    %1140 = vmatpush1.bf16.msra.mxu0 %v1091
    %1141 = vmatprep.subr.bf16.mxu0 0
    %1142 = vmatpush2.bf16.msra.mxu0 0
    %1143 = vmatprep.subr.bf16.mxu0 0
    %1144 = vmatpush2.bf16.msra.mxu0 0
    %1145 = vmatprep.subr.bf16.mxu0 0
    %1146 = vmatpush2.bf16.msra.mxu0 0
    %1147 = vmatprep.subr.bf16.mxu0 0
    %1148 = vmatpush2.bf16.msra.mxu0 0
    %1149 = vmatprep.subr.bf16.mxu0 0
    %1150 = vmatpush2.bf16.msra.mxu0 0
    %1151 = vmatprep.subr.bf16.mxu0 0
    %1152 = vmatpush2.bf16.msra.mxu0 0
    %1153 = vmatprep.subr.bf16.mxu0 0
    %1154 = vmatpush2.bf16.msra.mxu0 0
    %1155 = vmatprep.subr.bf16.mxu0 0
    %1156 = vmatpush2.bf16.msra.mxu0 0
    %1157 = vmatprep.mubr.bf16.mxu0 0
    %1158 = vmatmul.mubr.bf16.gmra.mxu0 %v1102
    %v1159 = vpop.f32.mrf.mxu0
    %v1160 = vadd.f32 %v1070, %v1159
    %v1161 = vpop.f32.mrf.mxu0
    %v1162 = vpop.f32.mrf.mxu0
    %v1163 = vadd.f32 %v1070, %v1162
    %v1164 = vpop.f32.mrf.mxu0
    %1165 = vmatprep.mubr.bf16.mxu0 0
    %1166 = vmatmul.mubr.bf16.gmra.mxu0 %v1105
    %v1167 = vpop.f32.mrf.mxu0
    %v1168 = vadd.f32 %v1070, %v1167
    %v1169 = vpop.f32.mrf.mxu0
    %v1170 = vpop.f32.mrf.mxu0
    %v1171 = vadd.f32 %v1070, %v1170
    %v1172 = vpop.f32.mrf.mxu0
    %1173 = vmatprep.mubr.bf16.mxu0 0
    %1174 = vmatmul.mubr.bf16.gmra.mxu0 %v1108
    %v1175 = vpop.f32.mrf.mxu0
    %v1176 = vadd.f32 %v1070, %v1175
    %v1177 = vpop.f32.mrf.mxu0
    %v1178 = vpop.f32.mrf.mxu0
    %v1179 = vadd.f32 %v1070, %v1178
    %v1180 = vpop.f32.mrf.mxu0
    %1181 = vmatprep.mubr.bf16.mxu0 0
    %1182 = vmatmul.mubr.bf16.gmra.mxu0 %v1111
    %v1183 = vpop.f32.mrf.mxu0
    %v1184 = vadd.f32 %v1070, %v1183
    %v1185 = vpop.f32.mrf.mxu0
    %v1186 = vpop.f32.mrf.mxu0
    %v1187 = vadd.f32 %v1070, %v1186
    %v1188 = vpop.f32.mrf.mxu0
    %1189 = vmatprep.mubr.bf16.mxu0 0
    %1190 = vmatmul.mubr.bf16.gmra.mxu0 %v1114
    %v1191 = vpop.f32.mrf.mxu0
    %v1192 = vadd.f32 %v1070, %v1191
    %v1193 = vpop.f32.mrf.mxu0
    %v1194 = vpop.f32.mrf.mxu0
    %v1195 = vadd.f32 %v1070, %v1194
    %v1196 = vpop.f32.mrf.mxu0
    %1197 = vmatprep.mubr.bf16.mxu0 0
    %1198 = vmatmul.mubr.bf16.gmra.mxu0 %v1117
    %v1199 = vpop.f32.mrf.mxu0
    %v1200 = vadd.f32 %v1070, %v1199
    %v1201 = vpop.f32.mrf.mxu0
    %v1202 = vpop.f32.mrf.mxu0
    %v1203 = vadd.f32 %v1070, %v1202
    %v1204 = vpop.f32.mrf.mxu0
    %1205 = vmatprep.mubr.bf16.mxu0 0
    %1206 = vmatmul.mubr.bf16.gmra.mxu0 %v1120
    %v1207 = vpop.f32.mrf.mxu0
    %v1208 = vadd.f32 %v1070, %v1207
    %v1209 = vpop.f32.mrf.mxu0
    %v1210 = vpop.f32.mrf.mxu0
    %v1211 = vadd.f32 %v1070, %v1210
    %v1212 = vpop.f32.mrf.mxu0
    %1213 = vmatprep.mubr.bf16.mxu0 0
    %1214 = vmatmul.mubr.bf16.gmra.mxu0 %v1123
    %v1215 = vpop.f32.mrf.mxu0
    %v1216 = vadd.f32 %v1070, %v1215
    %v1217 = vpop.f32.mrf.mxu0
    %v1218 = vpop.f32.mrf.mxu0
    %v1219 = vadd.f32 %v1070, %v1218
    %v1220 = vpop.f32.mrf.mxu0
    %1221 = vdwg.mxu0
    %v1222 = vxor.u32 %v1160, 2147483648
    %v1223 = vxor.u32 %v1163, 2147483648
    %v1224 = vxor.u32 %v1168, 2147483648
    %v1225 = vxor.u32 %v1171, 2147483648
    %v1226 = vxor.u32 %v1176, 2147483648
    %v1227 = vxor.u32 %v1179, 2147483648
    %v1228 = vxor.u32 %v1184, 2147483648
    %v1229 = vxor.u32 %v1187, 2147483648
    %v1230 = vxor.u32 %v1192, 2147483648
    %v1231 = vxor.u32 %v1195, 2147483648
    %v1232 = vxor.u32 %v1200, 2147483648
    %v1233 = vxor.u32 %v1203, 2147483648
    %v1234 = vxor.u32 %v1208, 2147483648
    %v1235 = vxor.u32 %v1211, 2147483648
    %v1236 = vxor.u32 %v1216, 2147483648
    %v1237 = vxor.u32 %v1219, 2147483648
    %v1238 = vmul.f32 %v1222, 1.442695
    %v1239 = vpow.pop %v1238
    %v1240 = vmul.f32 %v1223, 1.442695
    %v1241 = vpow.pop %v1240
    %v1242 = vmul.f32 %v1224, 1.442695
    %v1243 = vpow.pop %v1242
    %v1244 = vmul.f32 %v1225, 1.442695
    %v1245 = vpow.pop %v1244
    %v1246 = vmul.f32 %v1226, 1.442695
    %v1247 = vpow.pop %v1246
    %v1248 = vmul.f32 %v1227, 1.442695
    %v1249 = vpow.pop %v1248
    %v1250 = vmul.f32 %v1228, 1.442695
    %v1251 = vpow.pop %v1250
    %v1252 = vmul.f32 %v1229, 1.442695
    %v1253 = vpow.pop %v1252
    %v1254 = vmul.f32 %v1230, 1.442695
    %v1255 = vpow.pop %v1254
    %v1256 = vmul.f32 %v1231, 1.442695
    %v1257 = vpow.pop %v1256
    %v1258 = vmul.f32 %v1232, 1.442695
    %v1259 = vpow.pop %v1258
    %v1260 = vmul.f32 %v1233, 1.442695
    %v1261 = vpow.pop %v1260
    %v1262 = vmul.f32 %v1234, 1.442695
    %v1263 = vpow.pop %v1262
    %v1264 = vmul.f32 %v1235, 1.442695
    %v1265 = vpow.pop %v1264
    %v1266 = vmul.f32 %v1236, 1.442695
    %v1267 = vpow.pop %v1266
    %v1268 = vmul.f32 %v1237, 1.442695
    %v1269 = vpow.pop %v1268
    %v1270 = vadd.f32 %v1239, 1.0
    %v1271 = vadd.f32 %v1241, 1.0
    %v1272 = vadd.f32 %v1243, 1.0
    %v1273 = vadd.f32 %v1245, 1.0
    %v1274 = vadd.f32 %v1247, 1.0
    %v1275 = vadd.f32 %v1249, 1.0
    %v1276 = vadd.f32 %v1251, 1.0
    %v1277 = vadd.f32 %v1253, 1.0
    %v1278 = vadd.f32 %v1255, 1.0
    %v1279 = vadd.f32 %v1257, 1.0
    %v1280 = vadd.f32 %v1259, 1.0
    %v1281 = vadd.f32 %v1261, 1.0
    %v1282 = vadd.f32 %v1263, 1.0
    %v1283 = vadd.f32 %v1265, 1.0
    %v1284 = vadd.f32 %v1267, 1.0
    %v1285 = vadd.f32 %v1269, 1.0
    %v1286 = vrcp.pop %v1270
    %v1287 = vmul.f32 1.0, %v1286
    %v1288 = vrcp.pop %v1271
    %v1289 = vmul.f32 1.0, %v1288
    %v1290 = vrcp.pop %v1272
    %v1291 = vmul.f32 1.0, %v1290
    %v1292 = vrcp.pop %v1273
    %v1293 = vmul.f32 1.0, %v1292
    %v1294 = vrcp.pop %v1274
    %v1295 = vmul.f32 1.0, %v1294
    %v1296 = vrcp.pop %v1275
    %v1297 = vmul.f32 1.0, %v1296
    %v1298 = vrcp.pop %v1276
    %v1299 = vmul.f32 1.0, %v1298
    %v1300 = vrcp.pop %v1277
    %v1301 = vmul.f32 1.0, %v1300
    %v1302 = vrcp.pop %v1278
    %v1303 = vmul.f32 1.0, %v1302
    %v1304 = vrcp.pop %v1279
    %v1305 = vmul.f32 1.0, %v1304
    %v1306 = vrcp.pop %v1280
    %v1307 = vmul.f32 1.0, %v1306
    %v1308 = vrcp.pop %v1281
    %v1309 = vmul.f32 1.0, %v1308
    %v1310 = vrcp.pop %v1282
    %v1311 = vmul.f32 1.0, %v1310
    %v1312 = vrcp.pop %v1283
    %v1313 = vmul.f32 1.0, %v1312
    %v1314 = vrcp.pop %v1284
    %v1315 = vmul.f32 1.0, %v1314
    %v1316 = vrcp.pop %v1285
    %v1317 = vmul.f32 1.0, %v1316
    %s1318 = scalar_lea.vmem %s4, %s23
    %1319 = vst.msk [vmem:[%s1318] sm:$0xff] %vm51, %v1287
    %1320 = vst.msk [vmem:[%s1318 + $0x8] sm:$0xff] %vm51, %v1289
    %1321 = vst.msk [vmem:[%s1318 + $0x10] sm:$0xff] %vm51, %v1291
    %1322 = vst.msk [vmem:[%s1318 + $0x18] sm:$0xff] %vm51, %v1293
    %1323 = vst.msk [vmem:[%s1318 + $0x20] sm:$0xff] %vm51, %v1295
    %1324 = vst.msk [vmem:[%s1318 + $0x28] sm:$0xff] %vm51, %v1297
    %1325 = vst.msk [vmem:[%s1318 + $0x30] sm:$0xff] %vm51, %v1299
    %1326 = vst.msk [vmem:[%s1318 + $0x38] sm:$0xff] %vm51, %v1301
    %1327 = vst.msk [vmem:[%s1318 + $0x40] sm:$0xff] %vm51, %v1303
    %1328 = vst.msk [vmem:[%s1318 + $0x48] sm:$0xff] %vm51, %v1305
    %1329 = vst.msk [vmem:[%s1318 + $0x50] sm:$0xff] %vm51, %v1307
    %1330 = vst.msk [vmem:[%s1318 + $0x58] sm:$0xff] %vm51, %v1309
    %1331 = vst.msk [vmem:[%s1318 + $0x60] sm:$0xff] %vm51, %v1311
    %1332 = vst.msk [vmem:[%s1318 + $0x68] sm:$0xff] %vm51, %v1313
    %1333 = vst.msk [vmem:[%s1318 + $0x70] sm:$0xff] %vm51, %v1315
    %1334 = vst.msk [vmem:[%s1318 + $0x78] sm:$0xff] %vm51, %v1317
  $region18: #{_dae_forward_impl.1} parent=0 // loop_footer
    %s22 = sadd.s32 1, %s18
  $region19: #{_dae_forward_impl.1} parent=0 // loop_footer_branch
    %17 = sbr.rel target = $region15
  $region20: #{_dae_forward_impl.1} parent=0 // loop_exit
    _
  // Predicated region
  $region21: #{_dae_forward_impl.1} parent=0 // pred_check
    _
  $region22: #{_dae_forward_impl.1} parent=0 // pred_check_branch
    %1336 = sbr.rel (0) target = $region24
  $region23: #{_dae_forward_impl.1} parent=0 // pred_region
    _
  $region24: #{_dae_forward_impl.1} parent=0 // pred_fallthru
    _
  // Predicated region
  $region25: #{_dae_forward_impl.1} parent=0 // pred_check
    _
  $region26: #{_dae_forward_impl.1} parent=0 // pred_check_branch
    %1338 = sbr.rel (0) target = $region28
  $region27: #{_dae_forward_impl.1} parent=0 // pred_region
    _
  $region28: #{_dae_forward_impl.1} parent=0 // pred_fallthru
    _
  // Predicated region
  $region29: #{_dae_forward_impl.1} parent=0 // pred_check
    _
  $region30: #{_dae_forward_impl.1} parent=0 // pred_check_branch
    %1340 = sbr.rel (0) target = $region32
  $region31: #{_dae_forward_impl.1} parent=0 // pred_region
    _
  $region32: #{_dae_forward_impl.1} parent=0 // pred_fallthru
    _
  // Predicated region
  $region33: #{_dae_forward_impl.1} parent=0 // pred_check
    _
  $region34: #{_dae_forward_impl.1} parent=0 // pred_check_branch
    %1342 = sbr.rel (0) target = $region36
  $region35: #{_dae_forward_impl.1} parent=0 // pred_region
    _
  $region36: #{_dae_forward_impl.1} parent=0 // pred_fallthru
    _

</llo_original>
